<compile_context>
chip_gen: v6e
topology: v6e:2x2x1
jax: 0.10.0
libtpu: 0.0.40
codegen_flags: <defaults>
</compile_context>

<pallas_src>
import functools

import jax
import jax.numpy as jnp
from jax.experimental import pallas as pl
from jax.experimental.pallas import tpu as pltpu


def _round_up(x: int, m: int) -> int:
    return ((x + m - 1) // m) * m


# Fallback tile height for the (rare) large-batch path. 256 keeps the result
# tile aligned to the v6e/v7x 256-wide MXU; on v5e it just means two 128-wide
# passes per tile, which is fine (N here is only 128 after padding anyway).
_TM_LARGE = 256


def _linear_hswishlike_kernel(x_ref, w_ref, b_ref, o_ref):
    # l1 = x @ W^T + b
    l1 = (
        jnp.dot(x_ref[...], w_ref[...], preferred_element_type=jnp.float32)
        + b_ref[...]
    )
    # l2 = l1 * (clip(l1, 0, 6) + 3); out = l2 / 6   (divide folded to *1/6)
    out = l1 * ((jnp.clip(l1, 0.0, 6.0) + 3.0) * (1.0 / 6.0))
    o_ref[...] = out.astype(o_ref.dtype)


@jax.jit
def model_forward_padded(x_p, w_p, b_p):
    """x_p: (Bp, INp) f32, w_p: (INp, OUTp) f32, b_p: (1, OUTp) f32.

    All inputs are already (8,128)-aligned (padding hoisted to init / caller).
    Returns the padded (Bp, OUTp) output; caller slices if needed.
    """
    Bp, INp = x_p.shape
    OUTp = w_p.shape[1]

    if Bp <= _TM_LARGE:
        # Gridless single-tile kernel: whole arrays resident in VMEM, one dot,
        # fused epilogue. No grid loop / pipeline overhead.
        return pl.pallas_call(
            _linear_hswishlike_kernel,
            out_shape=jax.ShapeDtypeStruct((Bp, OUTp), jnp.float32),
            in_specs=[
                pl.BlockSpec(memory_space=pltpu.MemorySpace.VMEM),
                pl.BlockSpec(memory_space=pltpu.MemorySpace.VMEM),
                pl.BlockSpec(memory_space=pltpu.MemorySpace.VMEM),
            ],
            out_specs=pl.BlockSpec(memory_space=pltpu.MemorySpace.VMEM),
        )(x_p, w_p, b_p)

    # Large-batch fallback: 1-D grid over M only (K=INp is a single 128 tile,
    # weights/bias stay resident). "parallel" lets v7x shard across its 2 TCs.
    tm = _TM_LARGE
    assert Bp % tm == 0, "caller pads batch to a multiple of _TM_LARGE"
    grid = (Bp // tm,)
    return pl.pallas_call(
        _linear_hswishlike_kernel,
        out_shape=jax.ShapeDtypeStruct((Bp, OUTp), jnp.float32),
        grid_spec=pltpu.PrefetchScalarGridSpec(
            num_scalar_prefetch=0,
            grid=grid,
            in_specs=[
                pl.BlockSpec((tm, INp), lambda i: (i, 0)),
                pl.BlockSpec((INp, OUTp), lambda i: (0, 0)),
                pl.BlockSpec((1, OUTp), lambda i: (0, 0)),
            ],
            out_specs=pl.BlockSpec((tm, OUTp), lambda i: (i, 0)),
        ),
        compiler_params=pltpu.CompilerParams(
            dimension_semantics=("parallel",),
        ),
    )(x_p, w_p, b_p)


def init_padded_params(w, b):
    """Pad the (OUT, IN) weight and (OUT,) bias ONCE at model-init time."""
    out_f, in_f = w.shape
    INp = _round_up(in_f, 128)
    OUTp = _round_up(out_f, 128)
    w_t = jnp.transpose(w)  # (IN, OUT): kernel computes x @ W^T + b
    w_p = jnp.pad(w_t, ((0, INp - in_f), (0, OUTp - out_f)))
    b_p = jnp.pad(b.reshape(1, out_f), ((0, 0), (0, OUTp - out_f)))
    return w_p, b_p


def model_forward(x, w_p, b_p):
    """x: (B, IN) f32 with pre-padded params. Returns (B, OUT_true) f32."""
    B, in_f = x.shape
    INp = w_p.shape[0]
    # Pad only the activation on the hot path (batch to 8 / _TM_LARGE multiple,
    # features to the padded K width; padded K columns contribute 0).
    Bp = _round_up(B, 8) if B <= _TM_LARGE else _round_up(B, _TM_LARGE)
    x_p = jnp.pad(x, ((0, Bp - B), (0, INp - in_f)))
    out_p = model_forward_padded(x_p, w_p, b_p)
    return out_p  # padded; slice lazily at the consumer


if __name__ == "__main__":
    IN_FEATURES, OUT_FEATURES = 4, 8
    BATCH = 1

    key = jax.random.PRNGKey(0)
    kx, kw, kb = jax.random.split(key, 3)

    # Deterministic parameter init (uniform(-1/sqrt(fan_in), 1/sqrt(fan_in)))
    bound = 1.0 / (IN_FEATURES ** 0.5)
    w = jax.random.uniform(
        kw, (OUT_FEATURES, IN_FEATURES), jnp.float32, -bound, bound
    )
    b = jax.random.uniform(kb, (OUT_FEATURES,), jnp.float32, -bound, bound)

    x1 = jax.random.normal(kx, (BATCH, IN_FEATURES), jnp.float32)

    # Padding / transpose of parameters happens once, outside the hot path.
    w_p, b_p = init_padded_params(w, b)

    out_padded = model_forward(x1, w_p, b_p)
    out_padded = jax.block_until_ready(out_padded)
    out = out_padded[:BATCH, :OUT_FEATURES]

    # Reference in plain JAX
    l1 = x1 @ jnp.transpose(w) + b.reshape(1, OUT_FEATURES)
    ref = l1 * (jnp.clip(l1, 0.0, 6.0) + 3.0) / 6.0
    assert out.shape == (BATCH, OUT_FEATURES)
    assert jnp.allclose(out, ref, atol=1e-5, rtol=1e-5)

    print("KERNEL_OK")
</pallas_src>

<mosaic_0001>
module attributes {stable_mosaic.version = 11 : i64} {
  func.func @_linear_hswishlike_kernel(%arg0: memref<8x128xf32, #tpu.memory_space<vmem>>, %arg1: memref<128x128xf32, #tpu.memory_space<vmem>>, %arg2: memref<1x128xf32, #tpu.memory_space<vmem>>, %arg3: memref<8x128xf32, #tpu.memory_space<vmem>>) attributes {dimension_semantics = [], scalar_prefetch = 0 : i64, scratch_operands = 0 : i64, tpu.core_type = #tpu.core_type<tc>} {
    %c0 = arith.constant 0 : index
    %c0_0 = arith.constant 0 : index
    %0 = vector.load %arg0[%c0, %c0_0] : memref<8x128xf32, #tpu.memory_space<vmem>>, vector<8x128xf32>
    %c0_1 = arith.constant 0 : index
    %c0_2 = arith.constant 0 : index
    %1 = vector.load %arg1[%c0_1, %c0_2] : memref<128x128xf32, #tpu.memory_space<vmem>>, vector<128x128xf32>
    %cst = arith.constant dense<0.000000e+00> : vector<8x128xf32>
    %2 = tpu.matmul %0, %1, %cst {dimension_numbers = #tpu.dot_dimension_numbers<[1], [0], [0], [1], [0, 0, 1, 1], [], []>} : vector<8x128xf32>, vector<128x128xf32>, vector<8x128xf32> -> vector<8x128xf32>
    %c0_3 = arith.constant 0 : index
    %c0_4 = arith.constant 0 : index
    %3 = vector.load %arg2[%c0_3, %c0_4] : memref<1x128xf32, #tpu.memory_space<vmem>>, vector<1x128xf32>
    %4 = vector.broadcast %3 : vector<1x128xf32> to vector<8x128xf32>
    %5 = arith.addf %2, %4 : vector<8x128xf32>
    %cst_5 = arith.constant 0.000000e+00 : f32
    %cst_6 = arith.constant 6.000000e+00 : f32
    %6 = vector.broadcast %cst_5 : f32 to vector<8x128xf32>
    %7 = arith.maximumf %6, %5 : vector<8x128xf32>
    %8 = vector.broadcast %cst_6 : f32 to vector<8x128xf32>
    %9 = arith.minimumf %8, %7 : vector<8x128xf32>
    %cst_7 = arith.constant 3.000000e+00 : f32
    %10 = vector.broadcast %cst_7 : f32 to vector<8x128xf32>
    %11 = arith.addf %9, %10 : vector<8x128xf32>
    %cst_8 = arith.constant 0.166666672 : f32
    %12 = vector.broadcast %cst_8 : f32 to vector<8x128xf32>
    %13 = arith.mulf %11, %12 : vector<8x128xf32>
    %14 = arith.mulf %5, %13 : vector<8x128xf32>
    %c0_9 = arith.constant 0 : index
    %c0_10 = arith.constant 0 : index
    %15 = vector.load %arg3[%c0_9, %c0_10] : memref<8x128xf32, #tpu.memory_space<vmem>>, vector<8x128xf32>
    tpu.vector_store %arg3[%c0_9, %c0_10], %14 {strides = array<i32>} : memref<8x128xf32, #tpu.memory_space<vmem>>, vector<8x128xf32>,
    return
  }
}

</mosaic_0001>

<llo_original>
// kernel: model_forward_padded.1
$region0: #{model_forward_padded.1}
  #allocation0 [shape = 'u32[]', space=smem, size = 0x4, offset = 0x4, fixed_abs, tag = 'smem constant byte address 0x4 - core index']
  #allocation1 [shape = 'u32[144,128]{1,0:T(1,128)}', space=vmem, size = 0x12000, scoped, tag = 'internal scratch']
  %s0 = inlined_call_operand.hbm [shape: f32[8,128], index: 0, kind: input, shape index: {}]
  %s1 = inlined_call_operand.hbm [shape: f32[128,128], index: 1, kind: input, shape index: {}]
  %s2 = inlined_call_operand.vmem [shape: f32[1,128], index: 2, kind: input, shape index: {}]
  %s3 = inlined_call_operand.hbm [shape: f32[8,128], index: 3, kind: output, shape index: {}]
  %s4 = sld [smem:[#allocation0]]
  $region30: #{model_forward_padded.1} parent=0
    _
  %s6 = ssub.s32 1, %s4
  %s7 = scalar_select 0, %s6, %s4
  $region1: #{model_forward_padded.1} parent=0
    #allocation2 [shape = 'u8[4096]{0}', space=vmem, size = 0x1000, scoped, tag = 'input window, operand 0, single buffered']
    #allocation3 [shape = 's32[1]{0}', space=sflag, size = 0x4, scoped, tag = 'scoped memory for model_forward_padded.1']
    #allocation4 [shape = 's32[1]{0}', space=sflag, size = 0x4, scoped, tag = 'scoped memory for model_forward_padded.1']
    #allocation5 [shape = 'u8[65536]{0}', space=vmem, size = 0x10000, scoped, tag = 'input window, operand 1, single buffered']
    #allocation6 [shape = 's32[1]{0}', space=sflag, size = 0x4, scoped, tag = 'scoped memory for model_forward_padded.1']
    #allocation7 [shape = 'u8[4096]{0}', space=vmem, size = 0x1000, scoped, tag = 'output window, operand 0, single buffered']
    %8 = vsyncpa [#allocation3], 0
    %9 = vsyncpa [#allocation6], 0
    %10 = vsyncpa [#allocation4], 0
    // Predicated region
    $region2: #{model_forward_padded.1} parent=1 // pred_check
      _
    $region3: #{model_forward_padded.1} parent=1 // pred_check_branch
      %12 = sbr.rel (0) target = $region5
    $region4: #{model_forward_padded.1} parent=1 // pred_region
      %s14 = ssub.s32 128, 128
      %15 = vsyncadd [#allocation3], %s14
      %s17 = sshll.u32 [#allocation2], 4
      %s18 = int_to_ptr.vmem [resolvable:$true] %s17
      %20 = dma.hbm_to_vmem [thread:$0]  %s0, 128, %s18, [#allocation3]
    $region5: #{model_forward_padded.1} parent=1 // pred_fallthru
      _
    // Predicated region
    $region6: #{model_forward_padded.1} parent=1 // pred_check
      _
    $region7: #{model_forward_padded.1} parent=1 // pred_check_branch
      %22 = sbr.rel (0) target = $region9
    $region8: #{model_forward_padded.1} parent=1 // pred_region
      %s24 = ssub.s32 2048, 2048
      %25 = vsyncadd [#allocation6], %s24
      %s26 = sshll.u32 [#allocation5], 4
      %s27 = int_to_ptr.vmem [resolvable:$true] %s26
      %32 = dma.hbm_to_vmem [thread:$0]  %s1, 2048, %s27, [#allocation6], 128, 128, 8
    $region9: #{model_forward_padded.1} parent=1 // pred_fallthru
      _
    // Predicated region
    $region10: #{model_forward_padded.1} parent=1 // pred_check
      _
    $region11: #{model_forward_padded.1} parent=1 // pred_check_branch
      %34 = sbr.rel (0) target = $region13
    $region12: #{model_forward_padded.1} parent=1 // pred_region
      _
    $region13: #{model_forward_padded.1} parent=1 // pred_fallthru
      _
    // Predicated region
    $region14: #{model_forward_padded.1} parent=1 // pred_check
      _
    $region15: #{model_forward_padded.1} parent=1 // pred_check_branch
      %36 = sbr.rel (0) target = $region17
    $region16: #{model_forward_padded.1} parent=1 // pred_region
      %37 = dma.done [#allocation3], 128
    $region17: #{model_forward_padded.1} parent=1 // pred_fallthru
      _
    // Predicated region
    $region18: #{model_forward_padded.1} parent=1 // pred_check
      _
    $region19: #{model_forward_padded.1} parent=1 // pred_check_branch
      %39 = sbr.rel (0) target = $region21
    $region20: #{model_forward_padded.1} parent=1 // pred_region
      %40 = dma.done [#allocation6], 2048
    $region21: #{model_forward_padded.1} parent=1 // pred_fallthru
      _
    %v41 = vld [vmem:[#allocation2] sm:$0xff]
    %v42 = vld [vmem:[#allocation5] sm:$0xff]
    %v43 = vld [vmem:[#allocation5 + $0x8] sm:$0xff]
    %v44 = vld [vmem:[#allocation5 + $0x10] sm:$0xff]
    %v45 = vld [vmem:[#allocation5 + $0x18] sm:$0xff]
    %v46 = vld [vmem:[#allocation5 + $0x20] sm:$0xff]
    %v47 = vld [vmem:[#allocation5 + $0x28] sm:$0xff]
    %v48 = vld [vmem:[#allocation5 + $0x30] sm:$0xff]
    %v49 = vld [vmem:[#allocation5 + $0x38] sm:$0xff]
    %v50 = vld [vmem:[#allocation5 + $0x40] sm:$0xff]
    %v51 = vld [vmem:[#allocation5 + $0x48] sm:$0xff]
    %v52 = vld [vmem:[#allocation5 + $0x50] sm:$0xff]
    %v53 = vld [vmem:[#allocation5 + $0x58] sm:$0xff]
    %v54 = vld [vmem:[#allocation5 + $0x60] sm:$0xff]
    %v55 = vld [vmem:[#allocation5 + $0x68] sm:$0xff]
    %v56 = vld [vmem:[#allocation5 + $0x70] sm:$0xff]
    %v57 = vld [vmem:[#allocation5 + $0x78] sm:$0xff]
    %v58 = vld [vmem:[%s2] sm:$0x1]
    %v60 = vlaneseq
    %v61 = vshrl.u32 %v60, 7
    %v62 = vsub.s32 0, %v61
    %v63 = vrot.slane %v58, %v62
    %65 = vmatprep.subr.mxu0 0.0
    %66 = vmatpush1.msra.mxu0 %v57
    %67 = vmatprep.subr.mxu0 0.0
    %68 = vmatpush1.msra.mxu0 %v56
    %69 = vmatprep.subr.mxu0 0.0
    %70 = vmatpush1.msra.mxu0 %v55
    %71 = vmatprep.subr.mxu0 0.0
    %72 = vmatpush1.msra.mxu0 %v54
    %73 = vmatprep.subr.mxu0 0.0
    %74 = vmatpush1.msra.mxu0 %v53
    %75 = vmatprep.subr.mxu0 0.0
    %76 = vmatpush1.msra.mxu0 %v52
    %77 = vmatprep.subr.mxu0 0.0
    %78 = vmatpush1.msra.mxu0 %v51
    %79 = vmatprep.subr.mxu0 0.0
    %80 = vmatpush1.msra.mxu0 %v50
    %81 = vmatprep.subr.mxu0 0.0
    %82 = vmatpush1.msra.mxu0 %v49
    %83 = vmatprep.subr.mxu0 0.0
    %84 = vmatpush1.msra.mxu0 %v48
    %85 = vmatprep.subr.mxu0 0.0
    %86 = vmatpush1.msra.mxu0 %v47
    %87 = vmatprep.subr.mxu0 0.0
    %88 = vmatpush1.msra.mxu0 %v46
    %89 = vmatprep.subr.mxu0 0.0
    %90 = vmatpush1.msra.mxu0 %v45
    %91 = vmatprep.subr.mxu0 0.0
    %92 = vmatpush1.msra.mxu0 %v44
    %93 = vmatprep.subr.mxu0 0.0
    %94 = vmatpush1.msra.mxu0 %v43
    %95 = vmatprep.subr.mxu0 0.0
    %96 = vmatpush1.msra.mxu0 %v42
    %97 = vmatprep.subr.mxu0 0.0
    %98 = vmatpush2.msra.mxu0 0.0
    %99 = vmatprep.subr.mxu0 0.0
    %100 = vmatpush2.msra.mxu0 0.0
    %101 = vmatprep.subr.mxu0 0.0
    %102 = vmatpush2.msra.mxu0 0.0
    %103 = vmatprep.subr.mxu0 0.0
    %104 = vmatpush2.msra.mxu0 0.0
    %105 = vmatprep.subr.mxu0 0.0
    %106 = vmatpush2.msra.mxu0 0.0
    %107 = vmatprep.subr.mxu0 0.0
    %108 = vmatpush2.msra.mxu0 0.0
    %109 = vmatprep.subr.mxu0 0.0
    %110 = vmatpush2.msra.mxu0 0.0
    %111 = vmatprep.subr.mxu0 0.0
    %112 = vmatpush2.msra.mxu0 0.0
    %113 = vmatprep.subr.mxu0 0.0
    %114 = vmatpush2.msra.mxu0 0.0
    %115 = vmatprep.subr.mxu0 0.0
    %116 = vmatpush2.msra.mxu0 0.0
    %117 = vmatprep.subr.mxu0 0.0
    %118 = vmatpush2.msra.mxu0 0.0
    %119 = vmatprep.subr.mxu0 0.0
    %120 = vmatpush2.msra.mxu0 0.0
    %121 = vmatprep.subr.mxu0 0.0
    %122 = vmatpush2.msra.mxu0 0.0
    %123 = vmatprep.subr.mxu0 0.0
    %124 = vmatpush2.msra.mxu0 0.0
    %125 = vmatprep.subr.mxu0 0.0
    %126 = vmatpush2.msra.mxu0 0.0
    %127 = vmatprep.subr.mxu0 0.0
    %128 = vmatpush2.msra.mxu0 0.0
    %129 = vmatprep.mubr.f32.mxu0 0.0
    %130 = vmatmul.mubr.f32.gmra.mxu0 %v41
    %v131 = vpop.f32.mrf.mxu0
    %v132 = vadd.f32 %v63, %v131
    %v133 = vpop.f32.mrf.mxu0
    %134 = vdwg.mxu0
    %v135 = vmax.f32 %v132, 0.0
    %v136 = vmin.f32 %v135, 6.0
    %v137 = vadd.f32 %v136, 3.0
    %v138 = vmul.f32 %v137, 0.16666667
    %v139 = vmul.f32 %v132, %v138
    %140 = vst [vmem:[#allocation7] sm:$0xff] %v139
    // Predicated region
    $region22: #{model_forward_padded.1} parent=1 // pred_check
      _
    $region23: #{model_forward_padded.1} parent=1 // pred_check_branch
      %142 = sbr.rel (0) target = $region25
    $region24: #{model_forward_padded.1} parent=1 // pred_region
      %s144 = ssub.s32 128, 128
      %145 = vsyncadd [#allocation4], %s144
      %s147 = sshll.u32 [#allocation7], 4
      %s148 = int_to_ptr.vmem [resolvable:$true] %s147
      %150 = dma.vmem_to_hbm [thread:$0]  %s148, 128, %s3, [#allocation4]
    $region25: #{model_forward_padded.1} parent=1 // pred_fallthru
      _
    // Predicated region
    $region26: #{model_forward_padded.1} parent=1 // pred_check
      _
    $region27: #{model_forward_padded.1} parent=1 // pred_check_branch
      %152 = sbr.rel (0) target = $region29
    $region28: #{model_forward_padded.1} parent=1 // pred_region
      %153 = dma.done [#allocation4], 128
    $region29: #{model_forward_padded.1} parent=1 // pred_fallthru
      _
    %154 = vsyncpa [#allocation3], 1
    %155 = vsyncpa [#allocation6], 1
    %156 = vsyncpa [#allocation4], 1

</llo_original>
